<compile_context>
chip_gen: v6e
topology: v6e:2x2x1
jax: 0.10.0
libtpu: 0.0.40
codegen_flags: <defaults>
</compile_context>

<pallas_src>
import functools
import math

import jax
import jax.numpy as jnp
from jax import lax
from jax.experimental import pallas as pl
from jax.experimental.pallas import tpu as pltpu


# ---------------------------------------------------------------------------
# Helpers
# ---------------------------------------------------------------------------
def _round_up(x: int, m: int) -> int:
    return -(-x // m) * m


def _vmem_capacity_bytes() -> int:
    try:
        return int(pltpu.get_tpu_info().vmem_capacity_bytes)
    except Exception:
        pass
    try:
        if "v7" in jax.devices()[0].device_kind.lower():
            return 64 * 1024 * 1024          # per-TC VMEM on v7x
    except Exception:
        pass
    return 128 * 1024 * 1024                 # v5e / v6e physical VMEM


def _table_spec(V: int, D: int, index_map, single_buffer: bool) -> pl.BlockSpec:
    if single_buffer:
        # The table's block index never changes -> one VMEM buffer is enough
        # (halves the table's VMEM footprint vs. default double buffering).
        return pl.BlockSpec((V, D), index_map, pipeline_mode=pl.Buffered(1))
    return pl.BlockSpec((V, D), index_map)


def _with_table_buffer_fallback(run):
    # pl.Buffered(1) single-buffers the constant-index table block.  If this jax
    # version rejects it, gracefully fall back to default double buffering.
    try:
        return run(single_buffer_table=True)
    except Exception:
        return run(single_buffer_table=False)


# ---------------------------------------------------------------------------
# Path 1: small vocab -> one-hot matmul on the MXU (table resident in VMEM).
# ---------------------------------------------------------------------------
def _embed_onehot_kernel(ids_ref, table_ref, out_ref, *, scale):
    # ids_ref:   (T, 1) int32 token ids for this step (VMEM block)
    # table_ref: (V, D) embedding table, VMEM resident, constant block index
    # out_ref:   (T, D) dense output block
    tab = table_ref[...]                                       # (V, D)
    ids = ids_ref[...]                                         # (T, 1)
    T = ids.shape[0]
    V = tab.shape[0]
    eq = ids == lax.broadcasted_iota(jnp.int32, (T, V), 1)     # (T, V) one-hot mask
    one_hot = jnp.where(eq, 1.0, 0.0).astype(tab.dtype)
    acc = jnp.dot(one_hot, tab, preferred_element_type=jnp.float32)   # MXU gather
    out_ref[...] = (acc * scale).astype(out_ref.dtype)         # one scale, one dense store


# ---------------------------------------------------------------------------
# Path 2: medium vocab -> row gather from a VMEM-resident table, grouped stores.
# ---------------------------------------------------------------------------
def _embed_vmem_gather_kernel(ids_ref, table_ref, out_ref, *,
                              tokens_per_step, pack, scale):
    # ids_ref:   (n_total,) int32 ids in SMEM (scalar prefetch)
    # table_ref: (V, D) table in VMEM (constant block index)
    # out_ref:   (T, D) dense output block
    base = pl.program_id(0) * tokens_per_step
    n_groups = tokens_per_step // pack

    @pl.loop(0, n_groups)
    def _(g):
        g0 = pl.multiple_of(g * pack, pack)
        # Gather `pack` rows (one sublane-pack worth) and assemble a dense slab.
        rows = [table_ref[pl.ds(ids_ref[base + g0 + t], 1), :] for t in range(pack)]
        block = jnp.concatenate(rows, axis=0)                   # (pack, D)
        # Single f32 scale + one unmasked (pack, D) store per group.
        out_ref[pl.ds(g0, pack), :] = (
            block.astype(jnp.float32) * scale).astype(out_ref.dtype)


# ---------------------------------------------------------------------------
# Path 3: large vocab -> chunked, multi-buffered per-row DMA gather from HBM.
# The whole pipeline lives inside one grid step, so the grid axis is "parallel".
# ---------------------------------------------------------------------------
def _embed_hbm_kernel(ids_ref, table_hbm, out_ref, buf, sem, *,
                      tokens_per_step, chunk, n_buf, scale):
    # ids_ref:   (n_total,) int32 ids in SMEM (scalar prefetch)
    # table_hbm: (V, D) table left in HBM (memory_space=pl.ANY)
    # out_ref:   (T, D) dense output block
    # buf:       (n_buf, chunk, D) VMEM chunk buffers
    # sem:       (n_buf,) DMA semaphores (one per chunk slot -> coalesced waits)
    n_chunks = tokens_per_step // chunk
    base = pl.program_id(0) * tokens_per_step

    def issue(c, slot):
        off = base + c * chunk
        for t in range(chunk):                                 # `chunk` row DMAs in flight
            tok = ids_ref[off + t]
            pltpu.make_async_copy(
                table_hbm.at[pl.ds(tok, 1), :],
                buf.at[slot, pl.ds(t, 1), :],
                sem.at[slot],
            ).start()

    # Prime the pipeline with up to n_buf chunks of row DMAs in flight.
    for j in range(min(n_buf, n_chunks)):
        issue(j, j)

    @pl.loop(0, n_chunks)
    def _(c):
        slot = c % n_buf
        # One coalesced slab-sized wait per chunk: its byte count equals the sum of
        # the `chunk` row copies issued onto this slot's semaphore (src is shape-only).
        pltpu.make_async_copy(
            table_hbm.at[pl.ds(0, chunk), :],
            buf.at[slot],
            sem.at[slot],
        ).wait()

        g0 = pl.multiple_of(c * chunk, chunk)
        # Single dense f32 scale + one (chunk, D) store; free under the DMA bottleneck.
        out_ref[pl.ds(g0, chunk), :] = (
            buf[slot].astype(jnp.float32) * scale).astype(out_ref.dtype)

        # Refill this slot with the chunk n_buf ahead (if any).
        @pl.when(c + n_buf < n_chunks)
        def _():
            issue(c + n_buf, slot)


# ---------------------------------------------------------------------------
# pallas_call runners
# ---------------------------------------------------------------------------
def _run_onehot(flat_ids, table, *, T, n_steps, scale, vmem_limit, single_buffer_table):
    n_total = flat_ids.shape[0]
    V, D = table.shape
    ids2d = flat_ids.reshape(n_total, 1)
    return pl.pallas_call(
        functools.partial(_embed_onehot_kernel, scale=scale),
        out_shape=jax.ShapeDtypeStruct((n_total, D), table.dtype),
        grid_spec=pltpu.PrefetchScalarGridSpec(
            num_scalar_prefetch=0,
            grid=(n_steps,),
            in_specs=[
                pl.BlockSpec((T, 1), lambda i: (i, 0)),
                _table_spec(V, D, lambda i: (0, 0), single_buffer_table),
            ],
            out_specs=pl.BlockSpec((T, D), lambda i: (i, 0)),
        ),
        compiler_params=pltpu.CompilerParams(
            dimension_semantics=("parallel",),
            vmem_limit_bytes=vmem_limit,
        ),
    )(ids2d, table)


def _run_vmem_gather(flat_ids, table, *, T, n_steps, scale, pack, vmem_limit,
                     single_buffer_table):
    n_total = flat_ids.shape[0]
    V, D = table.shape
    return pl.pallas_call(
        functools.partial(_embed_vmem_gather_kernel,
                          tokens_per_step=T, pack=pack, scale=scale),
        out_shape=jax.ShapeDtypeStruct((n_total, D), table.dtype),
        grid_spec=pltpu.PrefetchScalarGridSpec(
            num_scalar_prefetch=1,                      # flat ids land in SMEM
            grid=(n_steps,),
            in_specs=[_table_spec(V, D, lambda i, ids: (0, 0), single_buffer_table)],
            out_specs=pl.BlockSpec((T, D), lambda i, ids: (i, 0)),
        ),
        compiler_params=pltpu.CompilerParams(
            dimension_semantics=("parallel",),
            vmem_limit_bytes=vmem_limit,
        ),
    )(flat_ids, table)


def _run_hbm(flat_ids, table, *, T, n_steps, scale, chunk, n_buf, vmem_limit):
    n_total = flat_ids.shape[0]
    V, D = table.shape
    return pl.pallas_call(
        functools.partial(_embed_hbm_kernel,
                          tokens_per_step=T, chunk=chunk, n_buf=n_buf, scale=scale),
        out_shape=jax.ShapeDtypeStruct((n_total, D), table.dtype),
        grid_spec=pltpu.PrefetchScalarGridSpec(
            num_scalar_prefetch=1,
            grid=(n_steps,),
            in_specs=[pl.BlockSpec(memory_space=pl.ANY)],      # table stays in HBM
            out_specs=pl.BlockSpec((T, D), lambda i, ids: (i, 0)),
            scratch_shapes=[
                pltpu.VMEM((n_buf, chunk, D), table.dtype),    # chunk buffers
                pltpu.SemaphoreType.DMA((n_buf,)),             # one sem per slot
            ],
        ),
        compiler_params=pltpu.CompilerParams(
            dimension_semantics=("parallel",),                 # self-contained per step
            vmem_limit_bytes=vmem_limit,
        ),
    )(flat_ids, table)


# ---------------------------------------------------------------------------
# Public wrapper: nn.Embedding(vocab, dim)(x) * sqrt(dim)
# ---------------------------------------------------------------------------
def input_embedding(token_ids: jax.Array, table: jax.Array, *,
                    tokens_per_step: int = 256,
                    onehot_max_vocab: int = 2048,
                    path: str | None = None) -> jax.Array:
    V, D = table.shape
    scale = float(math.sqrt(D))
    dtype_bytes = jnp.dtype(table.dtype).itemsize
    pack = max(8, 32 // dtype_bytes)          # sublane pack: 8 f32 / 16 bf16 / 32 int8

    # Clamp ids so an out-of-range token can never read stale VMEM or hard-fault a DMA.
    flat_ids = jnp.clip(token_ids.reshape(-1).astype(jnp.int32), 0, V - 1)
    n_tokens = int(flat_ids.shape[0])

    # Big, pack-aligned token tiles amortize the ~0.35us per-grid-step overhead and keep
    # the (T, D) output block stores lane/sublane dense; clamp for tiny inputs.
    T = max(pack, min(_round_up(int(tokens_per_step), pack),
                      _round_up(max(n_tokens, 1), pack)))
    n_pad = (-n_tokens) % T
    if n_pad:
        flat_ids = jnp.concatenate([flat_ids, jnp.zeros((n_pad,), jnp.int32)])
    n_total = n_tokens + n_pad
    n_steps = n_total // T

    # TODO(synk): for extremely large B*S (multi-100K tokens), deliver ids as per-step
    # SMEM blocks instead of one scalar-prefetch array (1-D SMEM pads to next_pow2(4N)).

    vmem_cap = _vmem_capacity_bytes()
    table_bytes = V * D * dtype_bytes
    out_blk = T * D * dtype_bytes
    onehot_need = table_bytes + 2 * out_blk + T * V * dtype_bytes + T * D * 4 + (2 << 20)
    gather_need = table_bytes + 2 * out_blk + 2 * pack * D * 4 + (2 << 20)

    n_buf = 4                                  # chunk buffers in flight on the HBM path
    chunk = math.gcd(T, 32)                    # rows per DMA wave (always divides T)
    hbm_need = n_buf * chunk * D * dtype_bytes + 2 * out_blk + (4 << 20)

    if path is None:
        if V <= onehot_max_vocab and onehot_need <= int(0.8 * vmem_cap):
            path = "onehot"
        elif gather_need <= int(0.8 * vmem_cap):
            path = "vmem"
        else:
            path = "hbm"

    def _limit(need):
        return int(min(int(0.9 * vmem_cap), max(32 * 1024 * 1024, int(need))))

    if path == "onehot":
        run = functools.partial(_run_onehot, flat_ids, table, T=T, n_steps=n_steps,
                                scale=scale, vmem_limit=_limit(onehot_need + table_bytes))
        out_flat = _with_table_buffer_fallback(run)
    elif path == "vmem":
        run = functools.partial(_run_vmem_gather, flat_ids, table, T=T, n_steps=n_steps,
                                scale=scale, pack=pack,
                                vmem_limit=_limit(gather_need + table_bytes))
        out_flat = _with_table_buffer_fallback(run)
    elif path == "hbm":
        out_flat = _run_hbm(flat_ids, table, T=T, n_steps=n_steps, scale=scale,
                            chunk=chunk, n_buf=n_buf, vmem_limit=_limit(hbm_need))
    else:
        raise ValueError(f"unknown path: {path!r}")

    if n_pad:
        out_flat = out_flat[:n_tokens]
    return out_flat.reshape(token_ids.shape + (D,))


if __name__ == "__main__":
    # Small deterministic setup consistent with InputEmbedding(embedding_dim, vocab_size).
    batch, seq = 2, 8
    vocab_size, embedding_dim = 64, 128

    key = jax.random.PRNGKey(0)
    k_tab, k_ids = jax.random.split(key)

    # nn.Embedding default init is N(0, 1).
    table = jax.random.normal(k_tab, (vocab_size, embedding_dim), dtype=jnp.float32)
    token_ids = jax.random.randint(k_ids, (batch, seq), 0, vocab_size, dtype=jnp.int32)

    ref = table[token_ids] * math.sqrt(embedding_dim)

    # Default path: one-hot MXU matmul (small vocab, VMEM-resident table).
    out = jax.block_until_ready(input_embedding(token_ids, table))
    assert out.shape == (batch, seq, embedding_dim)
    assert jnp.allclose(out, ref, atol=1e-5, rtol=1e-5), "onehot path mismatch"

    # VMEM-resident-table row-gather path (forced for coverage).
    out_vmem = jax.block_until_ready(input_embedding(token_ids, table, path="vmem"))
    assert jnp.allclose(out_vmem, ref, atol=1e-5, rtol=1e-5), "vmem path mismatch"

    # HBM-table chunked row-DMA gather path (forced for coverage).
    out_hbm = jax.block_until_ready(input_embedding(token_ids, table, path="hbm"))
    assert jnp.allclose(out_hbm, ref, atol=1e-5, rtol=1e-5), "hbm path mismatch"

    print("KERNEL_OK")
</pallas_src>

<mosaic_0001>
module attributes {stable_mosaic.version = 11 : i64} {
  func.func @_embed_onehot_kernel(%arg0: i32, %arg1: memref<16x1xi32, #tpu.memory_space<vmem>>, %arg2: memref<64x128xf32, #tpu.memory_space<vmem>>, %arg3: memref<16x128xf32, #tpu.memory_space<vmem>>) attributes {dimension_semantics = [#tpu.dimension_semantics<parallel>], iteration_bounds = array<i64: 1>, scalar_prefetch = 0 : i64, scratch_operands = 0 : i64, tpu.core_type = #tpu.core_type<tc>, window_params = [{transform_indices = @transform_0, window_bounds = array<i64: 16, 1>}, {pipeline_mode = #tpu.pipeline_mode<synchronous>, transform_indices = @transform_1, window_bounds = array<i64: 64, 128>}, {transform_indices = @transform_2, window_bounds = array<i64: 16, 128>}]} {
    %c0 = arith.constant 0 : index
    %c0_0 = arith.constant 0 : index
    %0 = vector.load %arg2[%c0, %c0_0] : memref<64x128xf32, #tpu.memory_space<vmem>>, vector<64x128xf32>
    %c0_1 = arith.constant 0 : index
    %c0_2 = arith.constant 0 : index
    %1 = vector.load %arg1[%c0_1, %c0_2] : memref<16x1xi32, #tpu.memory_space<vmem>>, vector<16x1xi32>
    %2 = tpu.iota {dimensions = array<i32: 1>} : vector<16x64xi32>
    %3 = vector.broadcast %1 : vector<16x1xi32> to vector<16x64xi32>
    %4 = arith.cmpi eq, %3, %2 : vector<16x64xi32>
    %cst = arith.constant 1.000000e+00 : f32
    %cst_3 = arith.constant 0.000000e+00 : f32
    %5 = vector.broadcast %cst : f32 to vector<16x64xf32>
    %6 = vector.broadcast %cst_3 : f32 to vector<16x64xf32>
    %7 = arith.select %4, %5, %6 : vector<16x64xi1>, vector<16x64xf32>
    %cst_4 = arith.constant dense<0.000000e+00> : vector<16x128xf32>
    %8 = tpu.matmul %7, %0, %cst_4 {dimension_numbers = #tpu.dot_dimension_numbers<[1], [0], [0], [1], [0, 0, 1, 1], [], []>} : vector<16x64xf32>, vector<64x128xf32>, vector<16x128xf32> -> vector<16x128xf32>
    %cst_5 = arith.constant 11.3137083 : f32
    %9 = vector.broadcast %cst_5 : f32 to vector<16x128xf32>
    %10 = arith.mulf %8, %9 : vector<16x128xf32>
    %c0_6 = arith.constant 0 : index
    %c0_7 = arith.constant 0 : index
    %11 = vector.load %arg3[%c0_6, %c0_7] : memref<16x128xf32, #tpu.memory_space<vmem>>, vector<16x128xf32>
    tpu.vector_store %arg3[%c0_6, %c0_7], %10 {strides = array<i32>} : memref<16x128xf32, #tpu.memory_space<vmem>>, vector<16x128xf32>,
    return
  }
  func.func @transform_0(%arg0: i32) -> (i32, i32) {
    %c0_i32 = arith.constant 0 : i32
    %c0_i32_0 = arith.constant 0 : i32
    return %arg0, %c0_i32 : i32, i32
  }
  func.func @transform_1(%arg0: i32) -> (i32, i32) {
    %c0_i32 = arith.constant 0 : i32
    %c0_i32_0 = arith.constant 0 : i32
    %c0_i32_1 = arith.constant 0 : i32
    return %c0_i32, %c0_i32_0 : i32, i32
  }
  func.func @transform_2(%arg0: i32) -> (i32, i32) {
    %c0_i32 = arith.constant 0 : i32
    %c0_i32_0 = arith.constant 0 : i32
    return %arg0, %c0_i32 : i32, i32
  }
}

module attributes {stable_mosaic.version = 11 : i64} {
  func.func @_embed_onehot_kernel(%arg0: i32, %arg1: memref<16x1xi32, #tpu.memory_space<vmem>>, %arg2: memref<64x128xf32, #tpu.memory_space<vmem>>, %arg3: memref<16x128xf32, #tpu.memory_space<vmem>>) attributes {dimension_semantics = [#tpu.dimension_semantics<parallel>], iteration_bounds = array<i64: 1>, scalar_prefetch = 0 : i64, scratch_operands = 0 : i64, tpu.core_type = #tpu.core_type<tc>, window_params = [{transform_indices = @transform_0, window_bounds = array<i64: 16, 1>}, {pipeline_mode = #tpu.pipeline_mode<synchronous>, transform_indices = @transform_1, window_bounds = array<i64: 64, 128>}, {transform_indices = @transform_2, window_bounds = array<i64: 16, 128>}]} {
    %c0 = arith.constant 0 : index
    %c0_0 = arith.constant 0 : index
    %0 = vector.load %arg2[%c0, %c0_0] : memref<64x128xf32, #tpu.memory_space<vmem>>, vector<64x128xf32>
    %c0_1 = arith.constant 0 : index
    %c0_2 = arith.constant 0 : index
    %1 = vector.load %arg1[%c0_1, %c0_2] : memref<16x1xi32, #tpu.memory_space<vmem>>, vector<16x1xi32>
    %2 = tpu.iota {dimensions = array<i32: 1>} : vector<16x64xi32>
    %3 = vector.broadcast %1 : vector<16x1xi32> to vector<16x64xi32>
    %4 = arith.cmpi eq, %3, %2 : vector<16x64xi32>
    %cst = arith.constant 1.000000e+00 : f32
    %cst_3 = arith.constant 0.000000e+00 : f32
    %5 = vector.broadcast %cst : f32 to vector<16x64xf32>
    %6 = vector.broadcast %cst_3 : f32 to vector<16x64xf32>
    %7 = arith.select %4, %5, %6 : vector<16x64xi1>, vector<16x64xf32>
    %cst_4 = arith.constant dense<0.000000e+00> : vector<16x128xf32>
    %8 = tpu.matmul %7, %0, %cst_4 {dimension_numbers = #tpu.dot_dimension_numbers<[1], [0], [0], [1], [0, 0, 1, 1], [], []>} : vector<16x64xf32>, vector<64x128xf32>, vector<16x128xf32> -> vector<16x128xf32>
    %cst_5 = arith.constant 11.3137083 : f32
    %9 = vector.broadcast %cst_5 : f32 to vector<16x128xf32>
    %10 = arith.mulf %8, %9 : vector<16x128xf32>
    %c0_6 = arith.constant 0 : index
    %c0_7 = arith.constant 0 : index
    %11 = vector.load %arg3[%c0_6, %c0_7] : memref<16x128xf32, #tpu.memory_space<vmem>>, vector<16x128xf32>
    tpu.vector_store %arg3[%c0_6, %c0_7], %10 {strides = array<i32>} : memref<16x128xf32, #tpu.memory_space<vmem>>, vector<16x128xf32>,
    return
  }
  func.func @transform_0(%arg0: i32) -> (i32, i32) {
    %c0_i32 = arith.constant 0 : i32
    %c0_i32_0 = arith.constant 0 : i32
    return %arg0, %c0_i32 : i32, i32
  }
  func.func @transform_1(%arg0: i32) -> (i32, i32) {
    %c0_i32 = arith.constant 0 : i32
    %c0_i32_0 = arith.constant 0 : i32
    %c0_i32_1 = arith.constant 0 : i32
    return %c0_i32, %c0_i32_0 : i32, i32
  }
  func.func @transform_2(%arg0: i32) -> (i32, i32) {
    %c0_i32 = arith.constant 0 : i32
    %c0_i32_0 = arith.constant 0 : i32
    return %arg0, %c0_i32 : i32, i32
  }
}

</mosaic_0001>

<llo_original>
// kernel: tpu_custom_call.1
$region0: #{tpu_custom_call.1}
  #allocation0 [shape = 'u32[]', space=smem, size = 0x4, offset = 0x4, fixed_abs, tag = 'smem constant byte address 0x4 - core index']
  #allocation1 [shape = 'u32[144,128]{1,0:T(1,128)}', space=vmem, size = 0x12000, scoped, tag = 'internal scratch']
  %s0 = inlined_call_operand.vmem [shape: s32[16,1], index: 0, kind: input, shape index: {}]
  %s1 = inlined_call_operand.hbm [shape: f32[64,128], index: 1, kind: input, shape index: {}]
  %s2 = inlined_call_operand.hbm [shape: f32[16,128], index: 2, kind: output, shape index: {}]
  %s3 = sld [smem:[#allocation0]]
  $region22: #{tpu_custom_call.1} parent=0
    _
  %s5 = ssub.s32 1, %s3
  %s6 = scalar_select 0, %s5, %s3
  $region1: #{tpu_custom_call.1} parent=0
    #allocation2 [shape = 'u8[32768]{0}', space=vmem, size = 0x8000, scoped, tag = 'input window, operand 1, single buffered']
    #allocation3 [shape = 's32[1]{0}', space=sflag, size = 0x4, scoped, tag = 'scoped memory for tpu_custom_call.1']
    #allocation4 [shape = 's32[1]{0}', space=sflag, size = 0x4, scoped, tag = 'scoped memory for tpu_custom_call.1']
    #allocation5 [shape = 'u8[8192]{0}', space=vmem, size = 0x2000, scoped, tag = 'output window, operand 0, single buffered']
    %7 = vsyncpa [#allocation3], 0
    %8 = vsyncpa [#allocation4], 0
    // Predicated region
    $region2: #{tpu_custom_call.1} parent=1 // pred_check
      _
    $region3: #{tpu_custom_call.1} parent=1 // pred_check_branch
      %10 = sbr.rel (0) target = $region5
    $region4: #{tpu_custom_call.1} parent=1 // pred_region
      _
    $region5: #{tpu_custom_call.1} parent=1 // pred_fallthru
      _
    // Predicated region
    $region6: #{tpu_custom_call.1} parent=1 // pred_check
      _
    $region7: #{tpu_custom_call.1} parent=1 // pred_check_branch
      %12 = sbr.rel (0) target = $region9
    $region8: #{tpu_custom_call.1} parent=1 // pred_region
      %s14 = ssub.s32 1024, 1024
      %15 = vsyncadd [#allocation3], %s14
      %s16 = sshll.u32 [#allocation2], 4
      %s17 = int_to_ptr.vmem [resolvable:$true] %s16
      %22 = dma.hbm_to_vmem [thread:$0]  %s1, 1024, %s17, [#allocation3], 128, 128, 8
    $region9: #{tpu_custom_call.1} parent=1 // pred_fallthru
      _
    // Predicated region
    $region10: #{tpu_custom_call.1} parent=1 // pred_check
      _
    $region11: #{tpu_custom_call.1} parent=1 // pred_check_branch
      %24 = sbr.rel (0) target = $region13
    $region12: #{tpu_custom_call.1} parent=1 // pred_region
      %25 = dma.done [#allocation3], 1024
    $region13: #{tpu_custom_call.1} parent=1 // pred_fallthru
      _
    %v26 = vld [vmem:[#allocation2] sm:$0xff]
    %v27 = vld [vmem:[#allocation2 + $0x8] sm:$0xff]
    %v28 = vld [vmem:[#allocation2 + $0x10] sm:$0xff]
    %v29 = vld [vmem:[#allocation2 + $0x18] sm:$0xff]
    %v30 = vld [vmem:[#allocation2 + $0x20] sm:$0xff]
    %v31 = vld [vmem:[#allocation2 + $0x28] sm:$0xff]
    %v32 = vld [vmem:[#allocation2 + $0x30] sm:$0xff]
    %v33 = vld [vmem:[#allocation2 + $0x38] sm:$0xff]
    %v34 = vld [vmem:[%s0] sm:$0xff]
    %v35 = vld [vmem:[%s0 + $0x8] sm:$0xff]
    %v36 = vlaneseq
    %v37 = vand.u32 %v36, 127
    %38 = vset.pattern.permute.xlu0 0
    %39 = vperm.xlu0 %38, %v34
    %v40 = vpop.permute.xlu0 %39
    %41 = vset.pattern.permute.xlu0 0
    %42 = vperm.xlu0 %41, %v35
    %v43 = vpop.permute.xlu0 %42
    %vm44 = vcmp.eq.s32.totalorder %v40, %v37
    %vm45 = vcmp.eq.s32.totalorder %v43, %v37
    %v46 = vsel %vm44, 1.0, 0.0
    %v47 = vsel %vm45, 1.0, 0.0
    %vm48 = vcmask 523264
    %v50 = vsel %vm48, %v46, 0
    %v53 = vsel %vm48, %v47, 0
    %55 = vmatprep.subr.mxu0 0.0
    %56 = vmatpush1.msra.mxu0 0.0
    %57 = vmatprep.subr.mxu0 0.0
    %58 = vmatpush1.msra.mxu0 0.0
    %59 = vmatprep.subr.mxu0 0.0
    %60 = vmatpush1.msra.mxu0 0.0
    %61 = vmatprep.subr.mxu0 0.0
    %62 = vmatpush1.msra.mxu0 0.0
    %63 = vmatprep.subr.mxu0 0.0
    %64 = vmatpush1.msra.mxu0 0.0
    %65 = vmatprep.subr.mxu0 0.0
    %66 = vmatpush1.msra.mxu0 0.0
    %67 = vmatprep.subr.mxu0 0.0
    %68 = vmatpush1.msra.mxu0 0.0
    %69 = vmatprep.subr.mxu0 0.0
    %70 = vmatpush1.msra.mxu0 0.0
    %71 = vmatprep.subr.mxu0 0.0
    %72 = vmatpush1.msra.mxu0 %v33
    %73 = vmatprep.subr.mxu0 0.0
    %74 = vmatpush1.msra.mxu0 %v32
    %75 = vmatprep.subr.mxu0 0.0
    %76 = vmatpush1.msra.mxu0 %v31
    %77 = vmatprep.subr.mxu0 0.0
    %78 = vmatpush1.msra.mxu0 %v30
    %79 = vmatprep.subr.mxu0 0.0
    %80 = vmatpush1.msra.mxu0 %v29
    %81 = vmatprep.subr.mxu0 0.0
    %82 = vmatpush1.msra.mxu0 %v28
    %83 = vmatprep.subr.mxu0 0.0
    %84 = vmatpush1.msra.mxu0 %v27
    %85 = vmatprep.subr.mxu0 0.0
    %86 = vmatpush1.msra.mxu0 %v26
    %87 = vmatprep.subr.mxu0 0.0
    %88 = vmatpush2.msra.mxu0 0.0
    %89 = vmatprep.subr.mxu0 0.0
    %90 = vmatpush2.msra.mxu0 0.0
    %91 = vmatprep.subr.mxu0 0.0
    %92 = vmatpush2.msra.mxu0 0.0
    %93 = vmatprep.subr.mxu0 0.0
    %94 = vmatpush2.msra.mxu0 0.0
    %95 = vmatprep.subr.mxu0 0.0
    %96 = vmatpush2.msra.mxu0 0.0
    %97 = vmatprep.subr.mxu0 0.0
    %98 = vmatpush2.msra.mxu0 0.0
    %99 = vmatprep.subr.mxu0 0.0
    %100 = vmatpush2.msra.mxu0 0.0
    %101 = vmatprep.subr.mxu0 0.0
    %102 = vmatpush2.msra.mxu0 0.0
    %103 = vmatprep.subr.mxu0 0.0
    %104 = vmatpush2.msra.mxu0 0.0
    %105 = vmatprep.subr.mxu0 0.0
    %106 = vmatpush2.msra.mxu0 0.0
    %107 = vmatprep.subr.mxu0 0.0
    %108 = vmatpush2.msra.mxu0 0.0
    %109 = vmatprep.subr.mxu0 0.0
    %110 = vmatpush2.msra.mxu0 0.0
    %111 = vmatprep.subr.mxu0 0.0
    %112 = vmatpush2.msra.mxu0 0.0
    %113 = vmatprep.subr.mxu0 0.0
    %114 = vmatpush2.msra.mxu0 0.0
    %115 = vmatprep.subr.mxu0 0.0
    %116 = vmatpush2.msra.mxu0 0.0
    %117 = vmatprep.subr.mxu0 0.0
    %118 = vmatpush2.msra.mxu0 0.0
    %119 = vmatprep.mubr.f32.mxu0 0.0
    %120 = vmatmul.mubr.f32.gmra.mxu0 %v50
    %v121 = vpop.f32.mrf.mxu0
    %v122 = vadd.f32 0.0, %v121
    %v123 = vpop.f32.mrf.mxu0
    %124 = vmatprep.mubr.f32.mxu0 0.0
    %125 = vmatmul.mubr.f32.gmra.mxu0 %v53
    %v126 = vpop.f32.mrf.mxu0
    %v127 = vadd.f32 0.0, %v126
    %v128 = vpop.f32.mrf.mxu0
    %129 = vdwg.mxu0
    %v130 = vmul.f32 %v122, 11.313708
    %v131 = vmul.f32 %v127, 11.313708
    %132 = vst [vmem:[#allocation5] sm:$0xff] %v130
    %133 = vst [vmem:[#allocation5 + $0x8] sm:$0xff] %v131
    // Predicated region
    $region14: #{tpu_custom_call.1} parent=1 // pred_check
      _
    $region15: #{tpu_custom_call.1} parent=1 // pred_check_branch
      %135 = sbr.rel (0) target = $region17
    $region16: #{tpu_custom_call.1} parent=1 // pred_region
      %s137 = ssub.s32 256, 256
      %138 = vsyncadd [#allocation4], %s137
      %s139 = sshll.u32 [#allocation5], 4
      %s140 = int_to_ptr.vmem [resolvable:$true] %s139
      %145 = dma.vmem_to_hbm [thread:$0]  %s140, 256, %s2, [#allocation4], 128, 128, 8
    $region17: #{tpu_custom_call.1} parent=1 // pred_fallthru
      _
    // Predicated region
    $region18: #{tpu_custom_call.1} parent=1 // pred_check
      _
    $region19: #{tpu_custom_call.1} parent=1 // pred_check_branch
      %147 = sbr.rel (0) target = $region21
    $region20: #{tpu_custom_call.1} parent=1 // pred_region
      %148 = dma.done [#allocation4], 256
    $region21: #{tpu_custom_call.1} parent=1 // pred_fallthru
      _
    %149 = vsyncpa [#allocation3], 1
    %150 = vsyncpa [#allocation4], 1

// kernel: tpu_custom_call.1
$region0: #{tpu_custom_call.1}
  #allocation0 [shape = 'u32[]', space=smem, size = 0x4, offset = 0x4, fixed_abs, tag = 'smem constant byte address 0x4 - core index']
  #allocation1 [shape = 'u32[144,128]{1,0:T(1,128)}', space=vmem, size = 0x12000, scoped, tag = 'internal scratch']
  %s0 = inlined_call_operand.vmem [shape: s32[16,1], index: 0, kind: input, shape index: {}]
  %s1 = inlined_call_operand.hbm [shape: f32[64,128], index: 1, kind: input, shape index: {}]
  %s2 = inlined_call_operand.hbm [shape: f32[16,128], index: 2, kind: output, shape index: {}]
  %s3 = sld [smem:[#allocation0]]
  $region22: #{tpu_custom_call.1} parent=0
    _
  %s5 = ssub.s32 1, %s3
  %s6 = scalar_select 0, %s5, %s3
  $region1: #{tpu_custom_call.1} parent=0
    #allocation2 [shape = 'u8[32768]{0}', space=vmem, size = 0x8000, scoped, tag = 'input window, operand 1, single buffered']
    #allocation3 [shape = 's32[1]{0}', space=sflag, size = 0x4, scoped, tag = 'scoped memory for tpu_custom_call.1']
    #allocation4 [shape = 's32[1]{0}', space=sflag, size = 0x4, scoped, tag = 'scoped memory for tpu_custom_call.1']
    #allocation5 [shape = 'u8[8192]{0}', space=vmem, size = 0x2000, scoped, tag = 'output window, operand 0, single buffered']
    %7 = vsyncpa [#allocation3], 0
    %8 = vsyncpa [#allocation4], 0
    // Predicated region
    $region2: #{tpu_custom_call.1} parent=1 // pred_check
      _
    $region3: #{tpu_custom_call.1} parent=1 // pred_check_branch
      %10 = sbr.rel (0) target = $region5
    $region4: #{tpu_custom_call.1} parent=1 // pred_region
      _
    $region5: #{tpu_custom_call.1} parent=1 // pred_fallthru
      _
    // Predicated region
    $region6: #{tpu_custom_call.1} parent=1 // pred_check
      _
    $region7: #{tpu_custom_call.1} parent=1 // pred_check_branch
      %12 = sbr.rel (0) target = $region9
    $region8: #{tpu_custom_call.1} parent=1 // pred_region
      %s14 = ssub.s32 1024, 1024
      %15 = vsyncadd [#allocation3], %s14
      %s16 = sshll.u32 [#allocation2], 4
      %s17 = int_to_ptr.vmem [resolvable:$true] %s16
      %22 = dma.hbm_to_vmem [thread:$0]  %s1, 1024, %s17, [#allocation3], 128, 128, 8
    $region9: #{tpu_custom_call.1} parent=1 // pred_fallthru
      _
    // Predicated region
    $region10: #{tpu_custom_call.1} parent=1 // pred_check
      _
    $region11: #{tpu_custom_call.1} parent=1 // pred_check_branch
      %24 = sbr.rel (0) target = $region13
    $region12: #{tpu_custom_call.1} parent=1 // pred_region
      %25 = dma.done [#allocation3], 1024
    $region13: #{tpu_custom_call.1} parent=1 // pred_fallthru
      _
    %v26 = vld [vmem:[#allocation2] sm:$0xff]
    %v27 = vld [vmem:[#allocation2 + $0x8] sm:$0xff]
    %v28 = vld [vmem:[#allocation2 + $0x10] sm:$0xff]
    %v29 = vld [vmem:[#allocation2 + $0x18] sm:$0xff]
    %v30 = vld [vmem:[#allocation2 + $0x20] sm:$0xff]
    %v31 = vld [vmem:[#allocation2 + $0x28] sm:$0xff]
    %v32 = vld [vmem:[#allocation2 + $0x30] sm:$0xff]
    %v33 = vld [vmem:[#allocation2 + $0x38] sm:$0xff]
    %v34 = vld [vmem:[%s0] sm:$0xff]
    %v35 = vld [vmem:[%s0 + $0x8] sm:$0xff]
    %v36 = vlaneseq
    %v37 = vand.u32 %v36, 127
    %38 = vset.pattern.permute.xlu0 0
    %39 = vperm.xlu0 %38, %v34
    %v40 = vpop.permute.xlu0 %39
    %41 = vset.pattern.permute.xlu0 0
    %42 = vperm.xlu0 %41, %v35
    %v43 = vpop.permute.xlu0 %42
    %vm44 = vcmp.eq.s32.totalorder %v40, %v37
    %vm45 = vcmp.eq.s32.totalorder %v43, %v37
    %v46 = vsel %vm44, 1.0, 0.0
    %v47 = vsel %vm45, 1.0, 0.0
    %vm48 = vcmask 523264
    %v50 = vsel %vm48, %v46, 0
    %v53 = vsel %vm48, %v47, 0
    %55 = vmatprep.subr.mxu0 0.0
    %56 = vmatpush1.msra.mxu0 0.0
    %57 = vmatprep.subr.mxu0 0.0
    %58 = vmatpush1.msra.mxu0 0.0
    %59 = vmatprep.subr.mxu0 0.0
    %60 = vmatpush1.msra.mxu0 0.0
    %61 = vmatprep.subr.mxu0 0.0
    %62 = vmatpush1.msra.mxu0 0.0
    %63 = vmatprep.subr.mxu0 0.0
    %64 = vmatpush1.msra.mxu0 0.0
    %65 = vmatprep.subr.mxu0 0.0
    %66 = vmatpush1.msra.mxu0 0.0
    %67 = vmatprep.subr.mxu0 0.0
    %68 = vmatpush1.msra.mxu0 0.0
    %69 = vmatprep.subr.mxu0 0.0
    %70 = vmatpush1.msra.mxu0 0.0
    %71 = vmatprep.subr.mxu0 0.0
    %72 = vmatpush1.msra.mxu0 %v33
    %73 = vmatprep.subr.mxu0 0.0
    %74 = vmatpush1.msra.mxu0 %v32
    %75 = vmatprep.subr.mxu0 0.0
    %76 = vmatpush1.msra.mxu0 %v31
    %77 = vmatprep.subr.mxu0 0.0
    %78 = vmatpush1.msra.mxu0 %v30
    %79 = vmatprep.subr.mxu0 0.0
    %80 = vmatpush1.msra.mxu0 %v29
    %81 = vmatprep.subr.mxu0 0.0
    %82 = vmatpush1.msra.mxu0 %v28
    %83 = vmatprep.subr.mxu0 0.0
    %84 = vmatpush1.msra.mxu0 %v27
    %85 = vmatprep.subr.mxu0 0.0
    %86 = vmatpush1.msra.mxu0 %v26
    %87 = vmatprep.subr.mxu0 0.0
    %88 = vmatpush2.msra.mxu0 0.0
    %89 = vmatprep.subr.mxu0 0.0
    %90 = vmatpush2.msra.mxu0 0.0
    %91 = vmatprep.subr.mxu0 0.0
    %92 = vmatpush2.msra.mxu0 0.0
    %93 = vmatprep.subr.mxu0 0.0
    %94 = vmatpush2.msra.mxu0 0.0
    %95 = vmatprep.subr.mxu0 0.0
    %96 = vmatpush2.msra.mxu0 0.0
    %97 = vmatprep.subr.mxu0 0.0
    %98 = vmatpush2.msra.mxu0 0.0
    %99 = vmatprep.subr.mxu0 0.0
    %100 = vmatpush2.msra.mxu0 0.0
    %101 = vmatprep.subr.mxu0 0.0
    %102 = vmatpush2.msra.mxu0 0.0
    %103 = vmatprep.subr.mxu0 0.0
    %104 = vmatpush2.msra.mxu0 0.0
    %105 = vmatprep.subr.mxu0 0.0
    %106 = vmatpush2.msra.mxu0 0.0
    %107 = vmatprep.subr.mxu0 0.0
    %108 = vmatpush2.msra.mxu0 0.0
    %109 = vmatprep.subr.mxu0 0.0
    %110 = vmatpush2.msra.mxu0 0.0
    %111 = vmatprep.subr.mxu0 0.0
    %112 = vmatpush2.msra.mxu0 0.0
    %113 = vmatprep.subr.mxu0 0.0
    %114 = vmatpush2.msra.mxu0 0.0
    %115 = vmatprep.subr.mxu0 0.0
    %116 = vmatpush2.msra.mxu0 0.0
    %117 = vmatprep.subr.mxu0 0.0
    %118 = vmatpush2.msra.mxu0 0.0
    %119 = vmatprep.mubr.f32.mxu0 0.0
    %120 = vmatmul.mubr.f32.gmra.mxu0 %v50
    %v121 = vpop.f32.mrf.mxu0
    %v122 = vadd.f32 0.0, %v121
    %v123 = vpop.f32.mrf.mxu0
    %124 = vmatprep.mubr.f32.mxu0 0.0
    %125 = vmatmul.mubr.f32.gmra.mxu0 %v53
    %v126 = vpop.f32.mrf.mxu0
    %v127 = vadd.f32 0.0, %v126
    %v128 = vpop.f32.mrf.mxu0
    %129 = vdwg.mxu0
    %v130 = vmul.f32 %v122, 11.313708
    %v131 = vmul.f32 %v127, 11.313708
    %132 = vst [vmem:[#allocation5] sm:$0xff] %v130
    %133 = vst [vmem:[#allocation5 + $0x8] sm:$0xff] %v131
    // Predicated region
    $region14: #{tpu_custom_call.1} parent=1 // pred_check
      _
    $region15: #{tpu_custom_call.1} parent=1 // pred_check_branch
      %135 = sbr.rel (0) target = $region17
    $region16: #{tpu_custom_call.1} parent=1 // pred_region
      %s137 = ssub.s32 256, 256
      %138 = vsyncadd [#allocation4], %s137
      %s139 = sshll.u32 [#allocation5], 4
      %s140 = int_to_ptr.vmem [resolvable:$true] %s139
      %145 = dma.vmem_to_hbm [thread:$0]  %s140, 256, %s2, [#allocation4], 128, 128, 8
    $region17: #{tpu_custom_call.1} parent=1 // pred_fallthru
      _
    // Predicated region
    $region18: #{tpu_custom_call.1} parent=1 // pred_check
      _
    $region19: #{tpu_custom_call.1} parent=1 // pred_check_branch
      %147 = sbr.rel (0) target = $region21
    $region20: #{tpu_custom_call.1} parent=1 // pred_region
      %148 = dma.done [#allocation4], 256
    $region21: #{tpu_custom_call.1} parent=1 // pred_fallthru
      _
    %149 = vsyncpa [#allocation3], 1
    %150 = vsyncpa [#allocation4], 1

</llo_original>
